<compile_context>
chip_gen: v7x
topology: tpu7x:2x2x1
jax: 0.10.0
libtpu: 0.0.40
codegen_flags: <defaults>
</compile_context>

<pallas_src>
import functools

import jax
import jax.numpy as jnp
import numpy as np
from jax.experimental import pallas as pl
from jax.experimental.pallas import tpu as pltpu


def _masksembles1d_kernel(x_ref, m_ref, o_ref):
    # x_ref: (1, TB, C)   m_ref: (1, 1, C) float32   o_ref: (1, TB, C) float32
    o_ref[...] = x_ref[...].astype(jnp.float32) * m_ref[...]


def _pick_block_rows(gs: int, row_bytes: int, target_bytes: int = 2 * 1024 * 1024) -> int:
    """Pick the batch-row tile inside one mask group.

    Whole group if it fits the per-block byte target, otherwise the largest
    multiple-of-8 divisor of gs under the target (keeps blocks big and the
    grid exactly divisible).  Falls back to the whole group for awkward group
    sizes (rare; only matters for very large, non-8-divisible groups).
    """
    if gs * row_bytes <= target_bytes:
        return gs
    max_rows = max(8, target_bytes // row_bytes)
    r = (max_rows // 8) * 8
    while r >= 8:
        if gs % r == 0:
            return r
        r -= 8
    return gs


@functools.partial(jax.jit, static_argnames=())
def masksembles1d_forward(x, masks):
    """Training-mode Masksembles1D forward.

    x:     (B, C)  any float dtype
    masks: (n, C)  binary float masks, B % n == 0
    returns (B, C) float32
    """
    B, C = x.shape
    n, Cm = masks.shape
    if Cm != C:
        raise ValueError(f"mask channels {Cm} != input channels {C}")
    if B % n != 0:
        raise ValueError(f"Batch size must be divisible by n, got batch {B} and n {n}")
    gs = B // n  # group size

    x3 = x.reshape(n, gs, C)
    masks3 = masks.astype(jnp.float32).reshape(n, 1, C)

    tb = _pick_block_rows(gs, C * 4)
    grid = (n, gs // tb)

    out = pl.pallas_call(
        _masksembles1d_kernel,
        out_shape=jax.ShapeDtypeStruct((n, gs, C), jnp.float32),
        grid=grid,
        in_specs=[
            # Many batch rows of one group per block; C (lane axis) is the full dim.
            pl.BlockSpec((1, tb, C), lambda g, j: (g, j, 0)),
            # Mask row selected per group directly from the (n, 1, C) table.
            pl.BlockSpec((1, 1, C), lambda g, j: (g, 0, 0)),
        ],
        out_specs=pl.BlockSpec((1, tb, C), lambda g, j: (g, j, 0)),
        compiler_params=pltpu.CompilerParams(
            dimension_semantics=("parallel", "parallel"),
            vmem_limit_bytes=32 * 1024 * 1024,
        ),
    )(x3, masks3)

    return out.reshape(B, C)


def make_masks(channels: int, n: int, scale: float, seed: int = 0):
    """Deterministic synthetic stand-in for common.generation_wrapper.

    Produces (n, channels) binary float32 masks, each row with roughly
    channels/scale active channels, selected via a seeded permutation.
    """
    # TODO(synk): the exact Masksembles overlap-structured mask generation
    # algorithm is not reproduced here; a deterministic per-row random
    # selection with the same sparsity is used instead.
    k = max(1, int(round(channels / scale)))
    key = jax.random.PRNGKey(seed)
    rows = []
    for i in range(n):
        ki = jax.random.fold_in(key, i)
        perm = jax.random.permutation(ki, channels)
        rows.append(jnp.zeros((channels,), jnp.float32).at[perm[:k]].set(1.0))
    return jnp.stack(rows, axis=0)


if __name__ == "__main__":
    # Module config: Masksembles1D(channels=16, n=4, scale=2.0); input (B, C).
    channels, n, scale = 16, 4, 2.0
    B = 8  # batch divisible by n (group size 2)

    key = jax.random.PRNGKey(0)
    x = jax.random.normal(key, (B, channels), dtype=jnp.float32)
    masks = make_masks(channels, n, scale, seed=0)

    out = jax.block_until_ready(masksembles1d_forward(x, masks))

    # Reference (plain JAX) check of the training-mode forward semantics.
    gs = B // n
    ref = (x * masks[jnp.arange(B) // gs]).astype(jnp.float32)
    np.testing.assert_allclose(np.asarray(out), np.asarray(ref), rtol=1e-6, atol=1e-6)
    assert out.shape == (B, channels) and out.dtype == jnp.float32

    print("KERNEL_OK")
</pallas_src>

<mosaic_0001>
module attributes {stable_mosaic.version = 11 : i64} {
  func.func @_masksembles1d_kernel(%arg0: i32, %arg1: i32, %arg2: memref<1x2x16xf32, #tpu.memory_space<vmem>>, %arg3: memref<1x1x16xf32, #tpu.memory_space<vmem>>, %arg4: memref<1x2x16xf32, #tpu.memory_space<vmem>>) attributes {dimension_semantics = [#tpu.dimension_semantics<parallel>, #tpu.dimension_semantics<parallel>], iteration_bounds = array<i64: 4, 1>, scalar_prefetch = 0 : i64, scratch_operands = 0 : i64, tpu.core_type = #tpu.core_type<tc>, window_params = [{transform_indices = @transform_0, window_bounds = array<i64: 1, 2, 16>}, {transform_indices = @transform_1, window_bounds = array<i64: 1, 1, 16>}, {transform_indices = @transform_2, window_bounds = array<i64: 1, 2, 16>}]} {
    %c0 = arith.constant 0 : index
    %c0_0 = arith.constant 0 : index
    %c0_1 = arith.constant 0 : index
    %0 = vector.load %arg2[%c0, %c0_0, %c0_1] : memref<1x2x16xf32, #tpu.memory_space<vmem>>, vector<1x2x16xf32>
    %c0_2 = arith.constant 0 : index
    %c0_3 = arith.constant 0 : index
    %c0_4 = arith.constant 0 : index
    %1 = vector.load %arg3[%c0_2, %c0_3, %c0_4] : memref<1x1x16xf32, #tpu.memory_space<vmem>>, vector<1x1x16xf32>
    %2 = vector.broadcast %1 : vector<1x1x16xf32> to vector<1x2x16xf32>
    %3 = arith.mulf %0, %2 : vector<1x2x16xf32>
    %c0_5 = arith.constant 0 : index
    %c0_6 = arith.constant 0 : index
    %c0_7 = arith.constant 0 : index
    %4 = vector.load %arg4[%c0_5, %c0_6, %c0_7] : memref<1x2x16xf32, #tpu.memory_space<vmem>>, vector<1x2x16xf32>
    tpu.vector_store %arg4[%c0_5, %c0_6, %c0_7], %3 {strides = array<i32>} : memref<1x2x16xf32, #tpu.memory_space<vmem>>, vector<1x2x16xf32>,
    return
  }
  func.func @transform_0(%arg0: i32, %arg1: i32) -> (i32, i32, i32) {
    %c0_i32 = arith.constant 0 : i32
    %c0_i32_0 = arith.constant 0 : i32
    return %arg0, %arg1, %c0_i32 : i32, i32, i32
  }
  func.func @transform_1(%arg0: i32, %arg1: i32) -> (i32, i32, i32) {
    %c0_i32 = arith.constant 0 : i32
    %c0_i32_0 = arith.constant 0 : i32
    %c0_i32_1 = arith.constant 0 : i32
    return %arg0, %c0_i32, %c0_i32_0 : i32, i32, i32
  }
  func.func @transform_2(%arg0: i32, %arg1: i32) -> (i32, i32, i32) {
    %c0_i32 = arith.constant 0 : i32
    %c0_i32_0 = arith.constant 0 : i32
    return %arg0, %arg1, %c0_i32 : i32, i32, i32
  }
}

</mosaic_0001>

<llo_original>
// kernel: masksembles1d_forward.1
$region0: #{masksembles1d_forward.1}
  #allocation0 [shape = 'u32[]', space=smem, size = 0x4, offset = 0x4, fixed_abs, tag = 'smem constant byte address 0x4 - core index']
  #allocation1 [shape = 'u32[144,128]{1,0:T(1,128)}', space=vmem, size = 0x12000, scoped, tag = 'internal scratch']
  %s0 = inlined_call_operand.hbm [shape: f32[4,2,16], index: 0, kind: input, shape index: {}]
  %s1 = inlined_call_operand.vmem [shape: f32[4,1,16], index: 1, kind: input, shape index: {}]
  %s2 = inlined_call_operand.hbm [shape: f32[4,2,16], index: 2, kind: output, shape index: {}]
  %s3 = sld [smem:[#allocation0]]
  $region45: #{masksembles1d_forward.1} parent=0
    _
  %s5 = ssub.s32 1, %s3
  %s6 = scalar_select 0, %s5, %s3
  $region1: #{masksembles1d_forward.1} parent=0
    #allocation2 [shape = 'u8[2048]{0}', space=vmem, size = 0x800, scoped, tag = 'input window, operand 0']
    #allocation3 [shape = 's32[2]{0}', space=sflag, size = 0x8, scoped, tag = 'scoped memory for masksembles1d_forward.1']
    #allocation4 [shape = 's32[2]{0}', space=sflag, size = 0x8, scoped, tag = 'scoped memory for masksembles1d_forward.1']
    #allocation5 [shape = 'u8[2048]{0}', space=vmem, size = 0x800, scoped, tag = 'output window, operand 0']
    %7 = vsyncpa [#allocation3], 0
    %s8 = scalar_lea.sflag [#allocation3], 1
    %9 = vsyncpa %s8, 0
    %10 = vsyncpa [#allocation4], 0
    %s11 = scalar_lea.sflag [#allocation4], 1
    %12 = vsyncpa %s11, 0
    loop: start=0, step=1, limit=6
    $region2: #{masksembles1d_forward.1} parent=1 // loop_pre_header
      _
    $region3: #{masksembles1d_forward.1} parent=1 // loop_header
      %s14 = sphi 0, %s18
      %p15 = scmp.ge.s32.totalorder %s14, 6
      %s21 = sphi 0, %s33
      %s22 = sphi 0, %s29
      %s23 = sphi 0, %s21
      %s24 = sphi 0, %s22
      %s25 = sphi 0, %s23
      %s26 = sphi 0, %s24
      %s38 = sphi 0, %s40
      %s41 = sphi 0, %s38
      %s42 = sphi 0, %s41
      %s58 = sphi 0, %s42
      %s64 = sphi 0, %s66
      %s67 = sphi 0, %s64
      %s68 = sphi 0, %s67
      %s84 = sphi 0, %s68
      %s92 = sphi 0, %s94
      %s95 = sphi 0, %s92
      %s96 = sphi 0, %s95
      %s112 = sphi 0, %s96
    $region4: #{masksembles1d_forward.1} parent=1 // loop_header_branch
      %17 = sbr.rel (%p15) target = $region8
    $region5: #{masksembles1d_forward.1} parent=1 // loop_body
      %s19 = ssub.s32 %s14, 1
      %s20 = ssub.s32 %s14, 2
      %s27 = sadd.s32 1, %s22
      %p28 = scmp.ge.s32.totalorder %s27, 1
      %s29 = scalar_select %p28, 0, %s27
      %s30 = sadd.s32 1, %s21
      %s31 = scalar_select %p28, %s30, %s21
      %p32 = scmp.ge.s32.totalorder %s31, 4
      %s33 = scalar_select %p32, 0, %s31
      %s34 = ssub.s32 %s21, %s33
      %s35 = ssub.s32 %s22, %s29
      %s36 = sor.u32 %s34, %s35
      %p37 = scmp.eq.s32.totalorder %s36, 0
      %s39 = sadd.s32 %s38, 1
      %s40 = scalar_select %p37, %s38, %s39
      %p43 = pneg %p37
      %p44 = scmp.eq.s32.totalorder %s14, 3
      %p45 = por %p43, %p44
      %p46 = scmp.ne.s32.totalorder %s38, %s41
      %p47 = scmp.eq.s32.totalorder %s14, 0
      %p48 = por %p46, %p47
      %p49 = scmp.ne.s32.totalorder %s38, %s41
      %p50 = scmp.eq.s32.totalorder %s19, 3
      %p51 = por %p49, %p50
      %p52 = scmp.ne.s32.totalorder %s41, %s42
      %p53 = scmp.eq.s32.totalorder %s19, 0
      %p54 = por %p52, %p53
      %p55 = scmp.ne.s32.totalorder %s41, %s42
      %p56 = scmp.eq.s32.totalorder %s20, 3
      %p57 = por %p55, %p56
      %p59 = scmp.ne.s32.totalorder %s42, %s58
      %p60 = scmp.eq.s32.totalorder %s20, 0
      %p61 = por %p59, %p60
      %s62 = ssub.s32 %s21, %s33
      %p63 = scmp.eq.s32.totalorder %s62, 0
      %s65 = sadd.s32 %s64, 1
      %s66 = scalar_select %p63, %s64, %s65
      %p69 = pneg %p63
      %p70 = scmp.eq.s32.totalorder %s14, 3
      %p71 = por %p69, %p70
      %p72 = scmp.ne.s32.totalorder %s64, %s67
      %p73 = scmp.eq.s32.totalorder %s14, 0
      %p74 = por %p72, %p73
      %p75 = scmp.ne.s32.totalorder %s64, %s67
      %p76 = scmp.eq.s32.totalorder %s19, 3
      %p77 = por %p75, %p76
      %p78 = scmp.ne.s32.totalorder %s67, %s68
      %p79 = scmp.eq.s32.totalorder %s19, 0
      %p80 = por %p78, %p79
      %p81 = scmp.ne.s32.totalorder %s67, %s68
      %p82 = scmp.eq.s32.totalorder %s20, 3
      %p83 = por %p81, %p82
      %p85 = scmp.ne.s32.totalorder %s68, %s84
      %p86 = scmp.eq.s32.totalorder %s20, 0
      %p87 = por %p85, %p86
      %s88 = ssub.s32 %s21, %s33
      %s89 = ssub.s32 %s22, %s29
      %s90 = sor.u32 %s88, %s89
      %p91 = scmp.eq.s32.totalorder %s90, 0
      %s93 = sadd.s32 %s92, 1
      %s94 = scalar_select %p91, %s92, %s93
      %p97 = pneg %p91
      %p98 = scmp.eq.s32.totalorder %s14, 3
      %p99 = por %p97, %p98
      %p100 = scmp.ne.s32.totalorder %s92, %s95
      %p101 = scmp.eq.s32.totalorder %s14, 0
      %p102 = por %p100, %p101
      %p103 = scmp.ne.s32.totalorder %s92, %s95
      %p104 = scmp.eq.s32.totalorder %s19, 3
      %p105 = por %p103, %p104
      %p106 = scmp.ne.s32.totalorder %s95, %s96
      %p107 = scmp.eq.s32.totalorder %s19, 0
      %p108 = por %p106, %p107
      %p109 = scmp.ne.s32.totalorder %s95, %s96
      %p110 = scmp.eq.s32.totalorder %s20, 3
      %p111 = por %p109, %p110
      %p113 = scmp.ne.s32.totalorder %s96, %s112
      %p114 = scmp.eq.s32.totalorder %s20, 0
      %p115 = por %p113, %p114
      %p116 = scmp.le.s32.totalorder 1, %s14
      %p117 = scmp.lt.s32.totalorder %s14, 5
      %p118 = pnand %p116, %p117
      %p119 = pneg %p118
      // Predicated region
      $region9: #{masksembles1d_forward.1} parent=5 // pred_check
        _
      $region10: #{masksembles1d_forward.1} parent=5 // pred_check_branch
        %121 = sbr.rel (%p118) target = $region12
      $region11: #{masksembles1d_forward.1} parent=5 // pred_region
        %s122 = ssub.s32 %s14, 1
      $region12: #{masksembles1d_forward.1} parent=5 // pred_fallthru
        _
      %p123 = scmp.lt.s32.totalorder %s14, 4
      // Predicated region
      $region13: #{masksembles1d_forward.1} parent=5 // pred_check
        %p124 = pneg %p123
      $region14: #{masksembles1d_forward.1} parent=5 // pred_check_branch
        %126 = sbr.rel (%p124) target = $region16
      $region15: #{masksembles1d_forward.1} parent=5 // pred_region
        // Predicated region
        $region17: #{masksembles1d_forward.1} parent=15 // pred_check
          %p127 = pneg %p48
        $region18: #{masksembles1d_forward.1} parent=15 // pred_check_branch
          %129 = sbr.rel (%p127) target = $region20
        $region19: #{masksembles1d_forward.1} parent=15 // pred_region
          %s130 = sand.u32 %s38, 1
          %s131 = scalar_lea.sflag [#allocation3], %s130
          %s132 = sand.u32 %s38, 1
          %s133 = smul.addr %s132, 2
          %s134 = scalar_lea.vmem [#allocation2], %s133
          %s136 = ssub.s32 32, 32
          %137 = vsyncadd %s131, %s136
          %s138 = sadd.s32 %s22, %s21
          %s139 = smul.addr %s138, 32
          %s140 = scalar_lea.hbm %s0, %s139
          %s142 = sshll.u32 %s134, 4
          %s143 = int_to_ptr.vmem [resolvable:$true] %s142
          %145 = dma.hbm_to_vmem [thread:$0]  %s140, 32, %s143, %s131
        $region20: #{masksembles1d_forward.1} parent=15 // pred_fallthru
          _
        // Predicated region
        $region21: #{masksembles1d_forward.1} parent=15 // pred_check
          %p146 = pneg %p74
        $region22: #{masksembles1d_forward.1} parent=15 // pred_check_branch
          %148 = sbr.rel (%p146) target = $region24
        $region23: #{masksembles1d_forward.1} parent=15 // pred_region
          %p149 = scmp.lt.s32.totalorder %s21, 3
          %s150 = scalar_select %p149, %s21, 3
          %s151 = scalar_lea.vmem %s1, %s150
        $region24: #{masksembles1d_forward.1} parent=15 // pred_fallthru
          _
      $region16: #{masksembles1d_forward.1} parent=5 // pred_fallthru
        _
      %p152 = scmp.le.s32.totalorder 1, %s14
      %p153 = scmp.lt.s32.totalorder %s14, 5
      %p154 = pnand %p152, %p153
      %p155 = pneg %p154
      // Predicated region
      $region25: #{masksembles1d_forward.1} parent=5 // pred_check
        _
      $region26: #{masksembles1d_forward.1} parent=5 // pred_check_branch
        %157 = sbr.rel (%p154) target = $region28
      $region27: #{masksembles1d_forward.1} parent=5 // pred_region
        %s158 = ssub.s32 %s14, 1
        %s159 = sand.u32 %s41, 1
        %s160 = scalar_lea.sflag [#allocation3], %s159
        %s161 = sand.u32 %s41, 1
        %s162 = smul.addr %s161, 2
        %s163 = scalar_lea.vmem [#allocation2], %s162
        // Predicated region
        $region29: #{masksembles1d_forward.1} parent=27 // pred_check
          %p164 = pneg %p54
        $region30: #{masksembles1d_forward.1} parent=27 // pred_check_branch
          %166 = sbr.rel (%p164) target = $region32
        $region31: #{masksembles1d_forward.1} parent=27 // pred_region
          %167 = dma.done %s160, 32
        $region32: #{masksembles1d_forward.1} parent=27 // pred_fallthru
          _
        %s168 = sand.u32 %s41, 1
        %s169 = scalar_lea.sflag [#allocation3], %s168
        %s170 = sand.u32 %s41, 1
        %s171 = smul.addr %s170, 2
        %s172 = scalar_lea.vmem [#allocation2], %s171
        %p173 = pneg %p54
        %p174 = pneg %p51
        %p175 = scmp.lt.s32.totalorder %s23, 3
        %s176 = scalar_select %p175, %s23, 3
        %s177 = scalar_lea.vmem %s1, %s176
        %p178 = pneg %p80
        %p179 = pneg %p77
        %p180 = pneg %p108
        %p181 = pneg %p105
        %s182 = sand.u32 %s95, 1
        %s183 = scalar_lea.sflag [#allocation4], %s182
        %s184 = sand.u32 %s95, 1
        %s185 = smul.addr %s184, 2
        %s186 = scalar_lea.vmem [#allocation5], %s185
        %p187 = scmp.lt.s32.totalorder %s23, 3
        %s188 = scalar_select %p187, %s23, 3
        %s189 = scalar_lea.vmem %s1, %s188
        %v190 = vld [vmem:[%s163] sm:$0x3]
        %v191 = vld [vmem:[%s189] sm:$0x1]
        %v193 = vlaneseq
        %v194 = vshrl.u32 %v193, 7
        %v195 = vsub.s32 0, %v194
        %v196 = vrot.slane %v191, %v195
        %v198 = vmul.f32 %v190, %v196
        %vm199 = vcmask 123904
        %200 = vst.msk [vmem:[%s186] sm:$0x3] %vm199, %v198
        %s201 = sand.u32 %s95, 1
        %s202 = scalar_lea.sflag [#allocation4], %s201
        %s203 = sand.u32 %s95, 1
        %s204 = smul.addr %s203, 2
        %s205 = scalar_lea.vmem [#allocation5], %s204
        // Predicated region
        $region33: #{masksembles1d_forward.1} parent=27 // pred_check
          %p206 = pneg %p105
        $region34: #{masksembles1d_forward.1} parent=27 // pred_check_branch
          %208 = sbr.rel (%p206) target = $region36
        $region35: #{masksembles1d_forward.1} parent=27 // pred_region
          %s210 = ssub.s32 32, 32
          %211 = vsyncadd %s202, %s210
          %s212 = sadd.s32 %s24, %s23
          %s213 = smul.addr %s212, 32
          %s214 = scalar_lea.hbm %s2, %s213
          %s216 = sshll.u32 %s205, 4
          %s217 = int_to_ptr.vmem [resolvable:$true] %s216
          %219 = dma.vmem_to_hbm [thread:$0]  %s217, 32, %s214, %s202
        $region36: #{masksembles1d_forward.1} parent=27 // pred_fallthru
          _
      $region28: #{masksembles1d_forward.1} parent=5 // pred_fallthru
        _
      %p220 = scmp.le.s32.totalorder 2, %s14
      // Predicated region
      $region37: #{masksembles1d_forward.1} parent=5 // pred_check
        %p221 = pneg %p220
      $region38: #{masksembles1d_forward.1} parent=5 // pred_check_branch
        %223 = sbr.rel (%p221) target = $region40
      $region39: #{masksembles1d_forward.1} parent=5 // pred_region
        %s224 = ssub.s32 %s14, 2
        // Predicated region
        $region41: #{masksembles1d_forward.1} parent=39 // pred_check
          %p225 = pneg %p111
        $region42: #{masksembles1d_forward.1} parent=39 // pred_check_branch
          %227 = sbr.rel (%p225) target = $region44
        $region43: #{masksembles1d_forward.1} parent=39 // pred_region
          %s228 = sand.u32 %s96, 1
          %s229 = scalar_lea.sflag [#allocation4], %s228
          %s230 = sand.u32 %s96, 1
          %s231 = smul.addr %s230, 2
          %s232 = scalar_lea.vmem [#allocation5], %s231
          %233 = dma.done %s229, 32
        $region44: #{masksembles1d_forward.1} parent=39 // pred_fallthru
          _
      $region40: #{masksembles1d_forward.1} parent=5 // pred_fallthru
        _
    $region6: #{masksembles1d_forward.1} parent=1 // loop_footer
      %s18 = sadd.s32 1, %s14
    $region7: #{masksembles1d_forward.1} parent=1 // loop_footer_branch
      %13 = sbr.rel target = $region3
    $region8: #{masksembles1d_forward.1} parent=1 // loop_exit
      _
    %234 = vsyncpa [#allocation3], 1
    %s235 = scalar_lea.sflag [#allocation3], 1
    %236 = vsyncpa %s235, 1
    %237 = vsyncpa [#allocation4], 1
    %s238 = scalar_lea.sflag [#allocation4], 1
    %239 = vsyncpa %s238, 1

</llo_original>
